<compile_context>
chip_gen: v7x
topology: tpu7x:2x2x1
jax: 0.10.0
libtpu: 0.0.40
codegen_flags: <defaults>
</compile_context>

<pallas_src>
import math
import functools

import jax
import jax.numpy as jnp
from jax.experimental import pallas as pl
from jax.experimental.pallas import tpu as pltpu

_DEFAULT_ALPHA = 1e-06


def _logit_kernel(x_ref, logpx_ref, y_ref, logp_ref, acc_ref, *, alpha, d_total):
    j = pl.program_id(1)

    @pl.when(j == 0)
    def _init():
        acc_ref[...] = jnp.zeros_like(acc_ref)

    x = x_ref[...].astype(jnp.float32)                    # (TB, K, TD)
    s = alpha + (1.0 - 2.0 * alpha) * x
    log_s = jnp.log(s)
    log_1ms = jnp.log(1.0 - s)

    y_ref[...] = (log_s - log_1ms).astype(y_ref.dtype)
    # Per-sample / per-fold-row partial sums of log(s) + log(1-s).
    acc_ref[...] += jnp.sum(log_s + log_1ms, axis=-1, keepdims=True)  # (TB, K, 1)

    @pl.when(j == pl.num_programs(1) - 1)
    def _fin():
        k = acc_ref.shape[1]
        acc = acc_ref[...]                                # (TB, K, 1)
        tot = acc[:, 0, :]                                # (TB, 1)
        for f in range(1, k):                             # tiny static unroll
            tot = tot + acc[:, f, :]
        const = d_total * math.log(1.0 - 2.0 * alpha)
        logp_ref[...] = (
            logpx_ref[...].astype(jnp.float32) + (tot - const)
        ).astype(logp_ref.dtype)


def _sigmoid_kernel(y_ref, logpy_ref, x_ref, logp_ref, acc_ref, *, alpha, d_total):
    j = pl.program_id(1)

    @pl.when(j == 0)
    def _init():
        acc_ref[...] = jnp.zeros_like(acc_ref)

    y = y_ref[...].astype(jnp.float32)                    # (TB, K, TD)
    s = jax.nn.sigmoid(y)                                 # == alpha + (1-2a)*x exactly
    inv = 1.0 / (1.0 - 2.0 * alpha)                       # compile-time constant
    x_ref[...] = ((s - alpha) * inv).astype(x_ref.dtype)

    log_s = jnp.log(s)
    log_1ms = jnp.log(1.0 - s)
    acc_ref[...] += jnp.sum(log_s + log_1ms, axis=-1, keepdims=True)  # (TB, K, 1)

    @pl.when(j == pl.num_programs(1) - 1)
    def _fin():
        k = acc_ref.shape[1]
        acc = acc_ref[...]
        tot = acc[:, 0, :]
        for f in range(1, k):
            tot = tot + acc[:, f, :]
        const = d_total * math.log(1.0 - 2.0 * alpha)
        logp_ref[...] = (
            logpy_ref[...].astype(jnp.float32) - (tot - const)
        ).astype(logp_ref.dtype)


def _pick_fold(d):
    """Fold K feature elements onto the sublane axis so even B<8 fills vregs."""
    for k in (8, 4, 2):
        if d % k == 0:
            return k
    return 1


def _pick_tile(n, max_tile, quantum):
    """Largest divisor of n that is <= max_tile and a multiple of quantum;
    falls back to the full dimension (always a legal BlockSpec size)."""
    if n <= max_tile:
        return n
    t = (max_tile // quantum) * quantum
    while t >= quantum:
        if n % t == 0:
            return t
        t -= quantum
    return n


def logit_transform(x, logpx=None, reg_states=tuple(), reverse=False,
                    alpha=_DEFAULT_ALPHA):
    """Pallas equivalent of LogitTransform.forward."""
    b = x.shape[0]
    d = 1
    for s in x.shape[1:]:
        d *= int(s)

    if logpx is None:
        logpx = jnp.zeros((b, 1), dtype=x.dtype)
    logpx2d = logpx.reshape(b, 1).astype(x.dtype)

    k = _pick_fold(d)
    cols = d // k
    x3 = x.reshape(b, k, cols)                  # contiguous view, no data movement

    tb = _pick_tile(b, max(8, 256 // k), 8)     # sample tile (sublane-quantized)
    td = _pick_tile(cols, 2048, 128)            # feature tile (lane-quantized)
    grid = (b // tb, cols // td)

    kernel = _sigmoid_kernel if reverse else _logit_kernel
    itemsize = x.dtype.itemsize
    n_trans = (3 if reverse else 2) * b * d     # sigmoid+2 logs vs 2 logs

    y3, logp = pl.pallas_call(
        functools.partial(kernel, alpha=float(alpha), d_total=float(d)),
        out_shape=(
            jax.ShapeDtypeStruct((b, k, cols), x.dtype),
            jax.ShapeDtypeStruct((b, 1), x.dtype),
        ),
        grid_spec=pltpu.PrefetchScalarGridSpec(
            num_scalar_prefetch=0,
            grid=grid,
            in_specs=[
                pl.BlockSpec((tb, k, td), lambda i, j: (i, 0, j)),
                pl.BlockSpec((tb, 1), lambda i, j: (i, 0)),
            ],
            out_specs=[
                pl.BlockSpec((tb, k, td), lambda i, j: (i, 0, j)),
                pl.BlockSpec((tb, 1), lambda i, j: (i, 0)),
            ],
            scratch_shapes=[pltpu.VMEM((tb, k, 1), jnp.float32)],
        ),
        compiler_params=pltpu.CompilerParams(
            dimension_semantics=("parallel", "arbitrary"),
            vmem_limit_bytes=32 * 1024 * 1024,
        ),
        cost_estimate=pl.CostEstimate(
            flops=int(6 * b * d),
            transcendentals=int(n_trans),
            bytes_accessed=int(2 * b * d * itemsize + 4 * b * itemsize),
        ),
    )(x3, logpx2d)

    return y3.reshape(x.shape), logp, reg_states


# ----------------------------- references ----------------------------------


def _ref_forward(x, logpx, alpha=_DEFAULT_ALPHA):
    b = x.shape[0]
    xf = x.astype(jnp.float32).reshape(b, -1)
    s = alpha + (1.0 - 2.0 * alpha) * xf
    y = jnp.log(s) - jnp.log(1.0 - s)
    logdet = -jnp.log(s - s * s) + math.log(1.0 - 2.0 * alpha)
    logp = logpx.reshape(b, 1).astype(jnp.float32) - logdet.sum(1, keepdims=True)
    return y.reshape(x.shape).astype(x.dtype), logp.astype(x.dtype)


def _ref_reverse(y, logpy, alpha=_DEFAULT_ALPHA):
    b = y.shape[0]
    yf = y.astype(jnp.float32).reshape(b, -1)
    xx = (jax.nn.sigmoid(yf) - alpha) / (1.0 - 2.0 * alpha)
    s = alpha + (1.0 - 2.0 * alpha) * xx
    logdet = -jnp.log(s - s * s) + math.log(1.0 - 2.0 * alpha)
    logp = logpy.reshape(b, 1).astype(jnp.float32) + logdet.sum(1, keepdims=True)
    return xx.reshape(y.shape).astype(y.dtype), logp.astype(y.dtype)


if __name__ == "__main__":
    key = jax.random.PRNGKey(0)

    shapes = [
        (2, 4, 16, 16),     # small NCHW shape implied by the module
        (16, 12, 64, 64),   # multi-step feature grid (accumulator across j)
        (64, 3, 32, 32),    # multi-tile batch grid ("parallel" axis)
    ]

    for idx, shape in enumerate(shapes):
        kx = jax.random.fold_in(key, idx)
        x = jax.random.uniform(kx, shape, dtype=jnp.float32,
                               minval=0.01, maxval=0.99)

        # Forward (logit) path.
        y, logp, _ = logit_transform(x, logpx=None, reverse=False)
        jax.block_until_ready((y, logp))
        y_ref, logp_ref = _ref_forward(x, jnp.zeros((shape[0], 1), jnp.float32))
        assert jnp.allclose(y, y_ref, rtol=1e-5, atol=1e-5), f"y mismatch {shape}"
        assert jnp.allclose(logp, logp_ref, rtol=1e-4, atol=1e-3), \
            f"logpx mismatch {shape}"

        # Reverse (sigmoid) path.
        x_back, logp_back, _ = logit_transform(y, logpx=logp, reverse=True)
        jax.block_until_ready((x_back, logp_back))
        _, logp_back_ref = _ref_reverse(y_ref, logp_ref)
        assert jnp.allclose(x_back, x, rtol=1e-4, atol=1e-4), \
            f"roundtrip x mismatch {shape}"
        scale = float(jnp.max(jnp.abs(logp_ref)))
        bound = 1e-5 * scale + 1e-3
        assert float(jnp.max(jnp.abs(logp_back - logp_back_ref))) <= bound, \
            f"reverse logpx mismatch {shape}"

    print("KERNEL_OK")
</pallas_src>

<mosaic_0001>
module attributes {stable_mosaic.version = 11 : i64} {
  func.func @_logit_kernel(%arg0: i32, %arg1: i32, %arg2: memref<2x8x128xf32, #tpu.memory_space<vmem>>, %arg3: memref<2x1xf32, #tpu.memory_space<vmem>>, %arg4: memref<2x8x128xf32, #tpu.memory_space<vmem>>, %arg5: memref<2x1xf32, #tpu.memory_space<vmem>>, %arg6: memref<2x8x1xf32, #tpu.memory_space<vmem>>) attributes {dimension_semantics = [#tpu.dimension_semantics<parallel>, #tpu.dimension_semantics<arbitrary>], iteration_bounds = array<i64: 1, 1>, scalar_prefetch = 0 : i64, scratch_operands = 1 : i64, tpu.core_type = #tpu.core_type<tc>, window_params = [{transform_indices = @transform_0, window_bounds = array<i64: 2, 8, 128>}, {transform_indices = @transform_1, window_bounds = array<i64: 2, 1>}, {transform_indices = @transform_2, window_bounds = array<i64: 2, 8, 128>}, {transform_indices = @transform_3, window_bounds = array<i64: 2, 1>}]} {
    %c0_i32 = arith.constant 0 : i32
    %0 = arith.cmpi eq, %arg1, %c0_i32 : i32
    %1 = arith.extui %0 : i1 to i32
    %c0_i32_0 = arith.constant 0 : i32
    %2 = arith.cmpi ne, %1, %c0_i32_0 : i32
    scf.if %2 {
      %cst_17 = arith.constant 0.000000e+00 : f32
      %23 = vector.broadcast %cst_17 : f32 to vector<2x8x1xf32>
      %c0_18 = arith.constant 0 : index
      %c0_19 = arith.constant 0 : index
      %c0_20 = arith.constant 0 : index
      %24 = vector.load %arg6[%c0_18, %c0_19, %c0_20] : memref<2x8x1xf32, #tpu.memory_space<vmem>>, vector<2x8x1xf32>
      tpu.vector_store %arg6[%c0_18, %c0_19, %c0_20], %23 {strides = array<i32>} : memref<2x8x1xf32, #tpu.memory_space<vmem>>, vector<2x8x1xf32>,
    } else {
    }
    %c0 = arith.constant 0 : index
    %c0_1 = arith.constant 0 : index
    %c0_2 = arith.constant 0 : index
    %3 = vector.load %arg2[%c0, %c0_1, %c0_2] : memref<2x8x128xf32, #tpu.memory_space<vmem>>, vector<2x8x128xf32>
    %cst = arith.constant 0.999997973 : f32
    %4 = vector.broadcast %cst : f32 to vector<2x8x128xf32>
    %5 = arith.mulf %4, %3 : vector<2x8x128xf32>
    %cst_3 = arith.constant 9.99999997E-7 : f32
    %6 = vector.broadcast %cst_3 : f32 to vector<2x8x128xf32>
    %7 = arith.addf %6, %5 : vector<2x8x128xf32>
    %8 = math.log %7 : vector<2x8x128xf32>
    %cst_4 = arith.constant 1.000000e+00 : f32
    %9 = vector.broadcast %cst_4 : f32 to vector<2x8x128xf32>
    %10 = arith.subf %9, %7 : vector<2x8x128xf32>
    %11 = math.log %10 : vector<2x8x128xf32>
    %12 = arith.subf %8, %11 : vector<2x8x128xf32>
    %c0_5 = arith.constant 0 : index
    %c0_6 = arith.constant 0 : index
    %c0_7 = arith.constant 0 : index
    %13 = vector.load %arg4[%c0_5, %c0_6, %c0_7] : memref<2x8x128xf32, #tpu.memory_space<vmem>>, vector<2x8x128xf32>
    tpu.vector_store %arg4[%c0_5, %c0_6, %c0_7], %12 {strides = array<i32>} : memref<2x8x128xf32, #tpu.memory_space<vmem>>, vector<2x8x128xf32>,
    %c0_8 = arith.constant 0 : index
    %c0_9 = arith.constant 0 : index
    %c0_10 = arith.constant 0 : index
    %14 = vector.load %arg6[%c0_8, %c0_9, %c0_10] : memref<2x8x1xf32, #tpu.memory_space<vmem>>, vector<2x8x1xf32>
    %15 = arith.addf %8, %11 : vector<2x8x128xf32>
    %cst_11 = arith.constant dense<0.000000e+00> : vector<2x8xf32>
    %16 = vector.multi_reduction <add>, %15, %cst_11 [2] : vector<2x8x128xf32> to vector<2x8xf32>
    %17 = vector.shape_cast %16 : vector<2x8xf32> to vector<2x8x1xf32>
    %18 = arith.addf %14, %17 : vector<2x8x1xf32>
    %c0_12 = arith.constant 0 : index
    %c0_13 = arith.constant 0 : index
    %c0_14 = arith.constant 0 : index
    %19 = vector.load %arg6[%c0_12, %c0_13, %c0_14] : memref<2x8x1xf32, #tpu.memory_space<vmem>>, vector<2x8x1xf32>
    tpu.vector_store %arg6[%c0_12, %c0_13, %c0_14], %18 {strides = array<i32>} : memref<2x8x1xf32, #tpu.memory_space<vmem>>, vector<2x8x1xf32>,
    %c0_i32_15 = arith.constant 0 : i32
    %20 = arith.cmpi eq, %arg1, %c0_i32_15 : i32
    %21 = arith.extui %20 : i1 to i32
    %c0_i32_16 = arith.constant 0 : i32
    %22 = arith.cmpi ne, %21, %c0_i32_16 : i32
    scf.if %22 {
      %c0_17 = arith.constant 0 : index
      %c0_18 = arith.constant 0 : index
      %c0_19 = arith.constant 0 : index
      %23 = vector.load %arg6[%c0_17, %c0_18, %c0_19] : memref<2x8x1xf32, #tpu.memory_space<vmem>>, vector<2x8x1xf32>
      %24 = vector.extract_strided_slice %23 {offsets = [0, 0, 0], sizes = [2, 1, 1], strides = [1, 1, 1]} : vector<2x8x1xf32> to vector<2x1x1xf32>
      %25 = vector.shape_cast %24 : vector<2x1x1xf32> to vector<2x1xf32>
      %26 = vector.extract_strided_slice %23 {offsets = [0, 1, 0], sizes = [2, 1, 1], strides = [1, 1, 1]} : vector<2x8x1xf32> to vector<2x1x1xf32>
      %27 = vector.shape_cast %26 : vector<2x1x1xf32> to vector<2x1xf32>
      %28 = arith.addf %25, %27 : vector<2x1xf32>
      %29 = vector.extract_strided_slice %23 {offsets = [0, 2, 0], sizes = [2, 1, 1], strides = [1, 1, 1]} : vector<2x8x1xf32> to vector<2x1x1xf32>
      %30 = vector.shape_cast %29 : vector<2x1x1xf32> to vector<2x1xf32>
      %31 = arith.addf %28, %30 : vector<2x1xf32>
      %32 = vector.extract_strided_slice %23 {offsets = [0, 3, 0], sizes = [2, 1, 1], strides = [1, 1, 1]} : vector<2x8x1xf32> to vector<2x1x1xf32>
      %33 = vector.shape_cast %32 : vector<2x1x1xf32> to vector<2x1xf32>
      %34 = arith.addf %31, %33 : vector<2x1xf32>
      %35 = vector.extract_strided_slice %23 {offsets = [0, 4, 0], sizes = [2, 1, 1], strides = [1, 1, 1]} : vector<2x8x1xf32> to vector<2x1x1xf32>
      %36 = vector.shape_cast %35 : vector<2x1x1xf32> to vector<2x1xf32>
      %37 = arith.addf %34, %36 : vector<2x1xf32>
      %38 = vector.extract_strided_slice %23 {offsets = [0, 5, 0], sizes = [2, 1, 1], strides = [1, 1, 1]} : vector<2x8x1xf32> to vector<2x1x1xf32>
      %39 = vector.shape_cast %38 : vector<2x1x1xf32> to vector<2x1xf32>
      %40 = arith.addf %37, %39 : vector<2x1xf32>
      %41 = vector.extract_strided_slice %23 {offsets = [0, 6, 0], sizes = [2, 1, 1], strides = [1, 1, 1]} : vector<2x8x1xf32> to vector<2x1x1xf32>
      %42 = vector.shape_cast %41 : vector<2x1x1xf32> to vector<2x1xf32>
      %43 = arith.addf %40, %42 : vector<2x1xf32>
      %44 = vector.extract_strided_slice %23 {offsets = [0, 7, 0], sizes = [2, 1, 1], strides = [1, 1, 1]} : vector<2x8x1xf32> to vector<2x1x1xf32>
      %45 = vector.shape_cast %44 : vector<2x1x1xf32> to vector<2x1xf32>
      %46 = arith.addf %43, %45 : vector<2x1xf32>
      %c0_20 = arith.constant 0 : index
      %c0_21 = arith.constant 0 : index
      %47 = vector.load %arg3[%c0_20, %c0_21] : memref<2x1xf32, #tpu.memory_space<vmem>>, vector<2x1xf32>
      %cst_22 = arith.constant -0.00204800209 : f32
      %48 = vector.broadcast %cst_22 : f32 to vector<2x1xf32>
      %49 = arith.subf %46, %48 : vector<2x1xf32>
      %50 = arith.addf %47, %49 : vector<2x1xf32>
      %c0_23 = arith.constant 0 : index
      %c0_24 = arith.constant 0 : index
      %51 = vector.load %arg5[%c0_23, %c0_24] : memref<2x1xf32, #tpu.memory_space<vmem>>, vector<2x1xf32>
      tpu.vector_store %arg5[%c0_23, %c0_24], %50 {strides = array<i32>} : memref<2x1xf32, #tpu.memory_space<vmem>>, vector<2x1xf32>,
    } else {
    }
    return
  }
  func.func @transform_0(%arg0: i32, %arg1: i32) -> (i32, i32, i32) {
    %c0_i32 = arith.constant 0 : i32
    %c0_i32_0 = arith.constant 0 : i32
    return %arg0, %c0_i32, %arg1 : i32, i32, i32
  }
  func.func @transform_1(%arg0: i32, %arg1: i32) -> (i32, i32) {
    %c0_i32 = arith.constant 0 : i32
    %c0_i32_0 = arith.constant 0 : i32
    return %arg0, %c0_i32 : i32, i32
  }
  func.func @transform_2(%arg0: i32, %arg1: i32) -> (i32, i32, i32) {
    %c0_i32 = arith.constant 0 : i32
    %c0_i32_0 = arith.constant 0 : i32
    return %arg0, %c0_i32, %arg1 : i32, i32, i32
  }
  func.func @transform_3(%arg0: i32, %arg1: i32) -> (i32, i32) {
    %c0_i32 = arith.constant 0 : i32
    %c0_i32_0 = arith.constant 0 : i32
    return %arg0, %c0_i32 : i32, i32
  }
}

</mosaic_0001>

<llo_original>
// kernel: tpu_custom_call.1
$region0: #{tpu_custom_call.1}
  #allocation0 [shape = 'u32[]', space=smem, size = 0x4, offset = 0x4, fixed_abs, tag = 'smem constant byte address 0x4 - core index']
  #allocation1 [shape = 'u32[144,128]{1,0:T(1,128)}', space=vmem, size = 0x12000, scoped, tag = 'internal scratch']
  #allocation2 [shape = 'f32[2,8,1]{2,1,0:T(8,128)}', space=vmem, size = 0x2000, scoped, tag = 'scratch operand']
  %s0 = inlined_call_operand.hbm [shape: f32[2,8,128], index: 0, kind: input, shape index: {}]
  %s1 = inlined_call_operand.vmem [shape: f32[2,1], index: 1, kind: input, shape index: {}]
  %s2 = inlined_call_operand.hbm [shape: f32[2,8,128], index: 2, kind: output, shape index: {0}]
  %s3 = inlined_call_operand.vmem [shape: f32[2,1], index: 3, kind: output, shape index: {1}]
  %4 = xla_tuple %s2, %s3
  %s5 = sld [smem:[#allocation0]]
  $region38: #{tpu_custom_call.1} parent=0
    _
  %s7 = ssub.s32 1, %s5
  %s8 = scalar_select 0, %s7, %s5
  $region1: #{tpu_custom_call.1} parent=0
    #allocation3 [shape = 'u8[8192]{0}', space=vmem, size = 0x2000, scoped, tag = 'input window, operand 0, single buffered']
    #allocation4 [shape = 's32[1]{0}', space=sflag, size = 0x4, scoped, tag = 'scoped memory for tpu_custom_call.1']
    #allocation5 [shape = 's32[1]{0}', space=sflag, size = 0x4, scoped, tag = 'scoped memory for tpu_custom_call.1']
    #allocation6 [shape = 'u8[8192]{0}', space=vmem, size = 0x2000, scoped, tag = 'output window, operand 0, single buffered']
    %9 = vsyncpa [#allocation4], 0
    %10 = vsyncpa [#allocation5], 0
    // Predicated region
    $region2: #{tpu_custom_call.1} parent=1 // pred_check
      _
    $region3: #{tpu_custom_call.1} parent=1 // pred_check_branch
      %12 = sbr.rel (0) target = $region5
    $region4: #{tpu_custom_call.1} parent=1 // pred_region
      %s14 = ssub.s32 256, 256
      %15 = vsyncadd [#allocation4], %s14
      %s16 = sshll.u32 [#allocation3], 4
      %s17 = int_to_ptr.vmem [resolvable:$true] %s16
      %22 = dma.hbm_to_vmem [thread:$0]  %s0, 256, %s17, [#allocation4], 128, 128, 8
    $region5: #{tpu_custom_call.1} parent=1 // pred_fallthru
      _
    // Predicated region
    $region6: #{tpu_custom_call.1} parent=1 // pred_check
      _
    $region7: #{tpu_custom_call.1} parent=1 // pred_check_branch
      %24 = sbr.rel (0) target = $region9
    $region8: #{tpu_custom_call.1} parent=1 // pred_region
      _
    $region9: #{tpu_custom_call.1} parent=1 // pred_fallthru
      _
    // Predicated region
    $region10: #{tpu_custom_call.1} parent=1 // pred_check
      _
    $region11: #{tpu_custom_call.1} parent=1 // pred_check_branch
      %26 = sbr.rel (0) target = $region13
    $region12: #{tpu_custom_call.1} parent=1 // pred_region
      %27 = dma.done [#allocation4], 256
    $region13: #{tpu_custom_call.1} parent=1 // pred_fallthru
      _
    %p28 = scmp.eq.s32.totalorder 0, 0
    // Predicated region
    $region14: #{tpu_custom_call.1} parent=1 // pred_check
      %p29 = pneg %p28
    $region15: #{tpu_custom_call.1} parent=1 // pred_check_branch
      %31 = sbr.rel (%p29) target = $region17
    $region16: #{tpu_custom_call.1} parent=1 // pred_region
      %vm32 = vcmask 7168
      %33 = vst.msk [vmem:[#allocation2] sm:$0xff] %vm32, 0.0
      %34 = vst.msk [vmem:[#allocation2 + $0x8] sm:$0xff] %vm32, 0.0
    $region17: #{tpu_custom_call.1} parent=1 // pred_fallthru
      _
    %v35 = vld [vmem:[#allocation3] sm:$0xff]
    %v36 = vld [vmem:[#allocation3 + $0x8] sm:$0xff]
    %v37 = vmul.f32 %v35, 0.999998
    %v38 = vmul.f32 %v36, 0.999998
    %v39 = vadd.f32 %v37, 1e-06
    %v40 = vadd.f32 %v38, 1e-06
    %v41 = vlog2.pop %v39
    %v42 = vmul.f32 %v41, 0.6931472
    %v43 = vlog2.pop %v40
    %v44 = vmul.f32 %v43, 0.6931472
    %v45 = vsub.f32 1.0, %v39
    %v46 = vsub.f32 1.0, %v40
    %v47 = vlog2.pop %v45
    %v48 = vmul.f32 %v47, 0.6931472
    %v49 = vlog2.pop %v46
    %v50 = vmul.f32 %v49, 0.6931472
    %v51 = vsub.f32 %v42, %v48
    %v52 = vsub.f32 %v44, %v50
    %53 = vst [vmem:[#allocation6] sm:$0xff] %v51
    %54 = vst [vmem:[#allocation6 + $0x8] sm:$0xff] %v52
    %v55 = vld [vmem:[#allocation2] sm:$0xff]
    %v56 = vld [vmem:[#allocation2 + $0x8] sm:$0xff]
    %v57 = vadd.f32 %v42, %v48
    %v58 = vadd.f32 %v44, %v50
    %59 = vadd.xlane.f32.xlu0 %v57
    %v60 = vpop.xlane.xlu0 %59
    %61 = vadd.xlane.f32.xlu0 %v58
    %v62 = vpop.xlane.xlu0 %61
    %v63 = vadd.f32 %v55, %v60
    %v64 = vadd.f32 %v56, %v62
    %vm65 = vcmask 7168
    %66 = vst.msk [vmem:[#allocation2] sm:$0xff] %vm65, %v63
    %67 = vst.msk [vmem:[#allocation2 + $0x8] sm:$0xff] %vm65, %v64
    // Predicated region
    $region18: #{tpu_custom_call.1} parent=1 // pred_check
      %p68 = pneg %p28
    $region19: #{tpu_custom_call.1} parent=1 // pred_check_branch
      %70 = sbr.rel (%p68) target = $region21
    $region20: #{tpu_custom_call.1} parent=1 // pred_region
      %v71 = vld [vmem:[#allocation2] sm:$0xff]
      %v72 = vld [vmem:[#allocation2 + $0x8] sm:$0xff]
      %v75 = vrot.slane %v71, 1
      %v76 = vrot.slane %v72, 1
      %v79 = vadd.f32 %v71, %v75
      %v80 = vadd.f32 %v72, %v76
      %v81 = vrot.slane %v71, 2
      %v82 = vrot.slane %v72, 2
      %v85 = vadd.f32 %v79, %v81
      %v86 = vadd.f32 %v80, %v82
      %v87 = vrot.slane %v71, 3
      %v88 = vrot.slane %v72, 3
      %v91 = vadd.f32 %v85, %v87
      %v92 = vadd.f32 %v86, %v88
      %v93 = vrot.slane %v71, 4
      %v94 = vrot.slane %v72, 4
      %v97 = vadd.f32 %v91, %v93
      %v98 = vadd.f32 %v92, %v94
      %v99 = vrot.slane %v71, 5
      %v100 = vrot.slane %v72, 5
      %v103 = vadd.f32 %v97, %v99
      %v104 = vadd.f32 %v98, %v100
      %v105 = vrot.slane %v71, 6
      %v106 = vrot.slane %v72, 6
      %v109 = vadd.f32 %v103, %v105
      %v110 = vadd.f32 %v104, %v106
      %v111 = vrot.slane %v71, 7
      %v112 = vrot.slane %v72, 7
      %v115 = vadd.f32 %v109, %v111
      %v116 = vadd.f32 %v110, %v112
      %v117 = vld [vmem:[%s1] sm:$0x3]
      %v118 = vsub.f32 %v115, -0.002048002
      %v119 = vsub.f32 %v116, -0.002048002
      %v122 = vrot.slane %v119, 7
      %vm123 = vcmask 1041409
      %v124 = vsel %vm123, %v122, %v118
      %v126 = vadd.f32 %v117, %v124
      %vm127 = vcmask 1024
      %128 = vst.msk [vmem:[%s3] sm:$0x3] %vm127, %v126
    $region21: #{tpu_custom_call.1} parent=1 // pred_fallthru
      _
    // Predicated region
    $region22: #{tpu_custom_call.1} parent=1 // pred_check
      _
    $region23: #{tpu_custom_call.1} parent=1 // pred_check_branch
      %130 = sbr.rel (0) target = $region25
    $region24: #{tpu_custom_call.1} parent=1 // pred_region
      %s132 = ssub.s32 256, 256
      %133 = vsyncadd [#allocation5], %s132
      %s134 = sshll.u32 [#allocation6], 4
      %s135 = int_to_ptr.vmem [resolvable:$true] %s134
      %140 = dma.vmem_to_hbm [thread:$0]  %s135, 256, %s2, [#allocation5], 128, 128, 8
    $region25: #{tpu_custom_call.1} parent=1 // pred_fallthru
      _
    // Predicated region
    $region26: #{tpu_custom_call.1} parent=1 // pred_check
      _
    $region27: #{tpu_custom_call.1} parent=1 // pred_check_branch
      %142 = sbr.rel (0) target = $region29
    $region28: #{tpu_custom_call.1} parent=1 // pred_region
      _
    $region29: #{tpu_custom_call.1} parent=1 // pred_fallthru
      _
    // Predicated region
    $region30: #{tpu_custom_call.1} parent=1 // pred_check
      _
    $region31: #{tpu_custom_call.1} parent=1 // pred_check_branch
      %144 = sbr.rel (0) target = $region33
    $region32: #{tpu_custom_call.1} parent=1 // pred_region
      %145 = dma.done [#allocation5], 256
    $region33: #{tpu_custom_call.1} parent=1 // pred_fallthru
      _
    // Predicated region
    $region34: #{tpu_custom_call.1} parent=1 // pred_check
      _
    $region35: #{tpu_custom_call.1} parent=1 // pred_check_branch
      %147 = sbr.rel (0) target = $region37
    $region36: #{tpu_custom_call.1} parent=1 // pred_region
      _
    $region37: #{tpu_custom_call.1} parent=1 // pred_fallthru
      _
    %148 = vsyncpa [#allocation4], 1
    %149 = vsyncpa [#allocation5], 1

</llo_original>
